<compile_context>
chip_gen: v6e
topology: v6e:2x2x1
jax: 0.10.0
libtpu: 0.0.40
codegen_flags: <defaults>
</compile_context>

<pallas_src>
import math
import functools

import jax
import jax.numpy as jnp
from jax.experimental import pallas as pl
from jax.experimental.pallas import tpu as pltpu

_LANE_WIDTH = 512        # lane-dense slab width (multiple of 128 -> full-width vst)
_MAX_BLOCK_ROWS = 512    # (512, 512) f32 block = 1 MiB per buffer


# -----------------------------------------------------------------------------
# Slab layout helpers (wrapper side)
# -----------------------------------------------------------------------------
def _round_up(a, b):
    return pl.cdiv(a, b) * b


def _choose_block_rows(rows):
    if rows >= _MAX_BLOCK_ROWS:
        return _MAX_BLOCK_ROWS
    # keep packed-dtype (bf16/int8) sublane tiles full when the array is big
    # enough; tiny arrays just need a multiple of 8.
    mult = 32 if rows >= 32 else 8
    return _round_up(rows, mult)


def _slab_layout(n):
    rows = pl.cdiv(n, _LANE_WIDTH)
    block_rows = _choose_block_rows(rows)
    rows_padded = _round_up(rows, block_rows)
    return rows_padded, block_rows


def _to_slab(x, rows_padded):
    n = x.size
    total = rows_padded * _LANE_WIDTH
    flat = x.reshape(-1)
    if total != n:                            # skip the extra HBM pass when aligned
        flat = jnp.pad(flat, (0, total - n))  # zero padding (stats-safe)
    return flat.reshape(rows_padded, _LANE_WIDTH)


def _from_slab(slab, n, shape, dtype):
    flat = slab.reshape(-1)
    if flat.size != n:
        flat = flat[:n]
    return flat.reshape(shape).astype(dtype)


# -----------------------------------------------------------------------------
# Counter-based PRNG (portable: only int32 VPU ops, no pltpu.prng_*)
# -----------------------------------------------------------------------------
_M1 = -2048144789        # 0x85EBCA6B as int32
_M2 = -1028477387        # 0xC2B2AE35 as int32
_GOLD = -1640531527      # 0x9E3779B9 as int32


def _lshr(x, k):
    # logical right shift for int32 (arithmetic shift + mask)
    return (x >> k) & jnp.int32((1 << (32 - k)) - 1)


def _fmix32(x):
    x = x ^ _lshr(x, 16)
    x = x * jnp.int32(_M1)
    x = x ^ _lshr(x, 13)
    x = x * jnp.int32(_M2)
    x = x ^ _lshr(x, 16)
    return x


def _uniform_01(shape, seed, draw_id):
    """Open-interval U(0,1) block from a hash of (seed, draw_id, global index)."""
    r = jax.lax.broadcasted_iota(jnp.int32, shape, 0)
    c = jax.lax.broadcasted_iota(jnp.int32, shape, 1)
    base_row = pl.program_id(0) * shape[0]
    idx = (base_row + r) * shape[1] + c
    h = idx ^ (seed * jnp.int32(_GOLD))
    h = h + jnp.int32(draw_id) * jnp.int32(1013904223)
    h = _fmix32(h)
    h = _fmix32(h + jnp.int32(_GOLD))
    bits = _lshr(h, 8)                                  # 24 uniform bits, >= 0
    # +0.5 keeps u strictly inside (0,1) so log(u) / log(1-u) never hit -inf.
    return (bits.astype(jnp.float32) + 0.5) * jnp.float32(1.0 / (1 << 24))


# -----------------------------------------------------------------------------
# Inverse normal CDF (Acklam's rational approximation, |rel err| < 1.2e-9).
# Uses only log / sqrt / mul / add / where -> always lowers on Mosaic.
# -----------------------------------------------------------------------------
_A = (-3.969683028665376e+01, 2.209460984245205e+02, -2.759285104469687e+02,
      1.383577518672690e+02, -3.066479806614716e+01, 2.506628277459239e+00)
_B = (-5.447609879822406e+01, 1.615858368580409e+02, -1.556989798598866e+02,
      6.680131188771972e+01, -1.328068155288572e+01)
_C = (-7.784894002430293e-03, -3.223964580411365e-01, -2.400758277161838e+00,
      -2.549732539343734e+00, 4.374664141464968e+00, 2.938163982698783e+00)
_D = (7.784695709041462e-03, 3.224671290700398e-01, 2.445134137142996e+00,
      3.754408661907416e+00)
_P_LOW = 0.02425


def _inv_normal_cdf(u):
    # central region
    q = u - 0.5
    r = q * q
    num_c = ((((_A[0] * r + _A[1]) * r + _A[2]) * r + _A[3]) * r + _A[4]) * r + _A[5]
    den_c = ((((_B[0] * r + _B[1]) * r + _B[2]) * r + _B[3]) * r + _B[4]) * r + 1.0
    z_c = num_c * q / den_c
    # tails: evaluate on pt = min(u, 1-u) > 0, then fix the sign
    pt = jnp.minimum(u, 1.0 - u)
    qt = jnp.sqrt(-2.0 * jnp.log(pt))
    num_t = ((((_C[0] * qt + _C[1]) * qt + _C[2]) * qt + _C[3]) * qt + _C[4]) * qt + _C[5]
    den_t = (((_D[0] * qt + _D[1]) * qt + _D[2]) * qt + _D[3]) * qt + 1.0
    z_t = num_t / den_t                      # negative (lower-tail quantile)
    z_t = jnp.where(u < 0.5, z_t, -z_t)
    central = jnp.logical_and(u > _P_LOW, u < 1.0 - _P_LOW)
    return jnp.where(central, z_c, z_t)


# -----------------------------------------------------------------------------
# Kernels
# -----------------------------------------------------------------------------
def _stats_kernel(x_ref, sum_ref, sq_ref):
    """Tiled global sum / sum-of-squares (padding is zeros -> no mask needed)."""
    @pl.when(pl.program_id(0) == 0)
    def _init():
        sum_ref[...] = jnp.zeros_like(sum_ref)
        sq_ref[...] = jnp.zeros_like(sq_ref)

    xv = x_ref[...].astype(jnp.float32)
    sum_ref[...] += jnp.sum(xv)
    sq_ref[...] += jnp.sum(xv * xv)


def _uniform_noise_kernel(seed_ref, x_ref, o_ref, *, a_decay, mean_decay,
                          multiplicative):
    # noise*decay = mean*decay + (1 - 2*U) * a*decay,  a = sqrt(3 * factor)
    xv = x_ref[...].astype(jnp.float32)
    u = _uniform_01(xv.shape, seed_ref[0], 0)
    noise = mean_decay + (1.0 - 2.0 * u) * a_decay
    if multiplicative:
        out = xv * noise
    else:
        out = xv + noise
    o_ref[...] = out.astype(o_ref.dtype)


def _gaussian_noise_kernel(seed_ref, std_ref, x_ref, o_ref, *, mean_decay,
                           multiplicative):
    # noise*decay = mean*decay + z * (std*decay); std_ref already holds std*decay.
    xv = x_ref[...].astype(jnp.float32)
    u = _uniform_01(xv.shape, seed_ref[0], 0)
    z = _inv_normal_cdf(u)
    noise = mean_decay + z * std_ref[...]            # std_ref is (1,1), broadcasts
    if multiplicative:
        out = xv * noise
    else:
        out = xv + noise
    o_ref[...] = out.astype(o_ref.dtype)


# -----------------------------------------------------------------------------
# Wrappers
# -----------------------------------------------------------------------------
def _std_from_slab(slab, n, block_rows):
    """torch-style unbiased std over the original n elements (tiled reduction)."""
    grid = (slab.shape[0] // block_rows,)
    s, sq = pl.pallas_call(
        _stats_kernel,
        out_shape=(jax.ShapeDtypeStruct((1, 1), jnp.float32),
                   jax.ShapeDtypeStruct((1, 1), jnp.float32)),
        grid=grid,
        in_specs=[pl.BlockSpec((block_rows, _LANE_WIDTH), lambda i: (i, 0))],
        out_specs=(pl.BlockSpec((1, 1), lambda i: (0, 0)),
                   pl.BlockSpec((1, 1), lambda i: (0, 0))),
        compiler_params=pltpu.CompilerParams(dimension_semantics=("arbitrary",)),
    )(slab)
    s = s[0, 0]
    sq = sq[0, 0]
    denom = max(n - 1, 1)
    var = jnp.maximum(sq - s * s / n, 0.0) / denom
    return jnp.sqrt(var)


def pallas_std(x):
    n = x.size
    rows_padded, block_rows = _slab_layout(n)
    return _std_from_slab(_to_slab(x, rows_padded), n, block_rows)


class NoiseOp:
    """JAX/Pallas port of the PyTorch NoiseOp module (forward only)."""

    def __init__(self, noise_type, factor, mean, noise_mixture,
                 decay_scheduler=None, add_noise=True, args=None):
        self.noise_type = noise_type
        self.factor = factor
        self.mean = mean
        self.noise_mixture = noise_mixture
        self.decay_scheduler = decay_scheduler
        self.add_noise = add_noise
        self.args = args
        self.training = True

    def __call__(self, x, step, *, seed=0):
        if not (self.training and self.add_noise):
            return x

        if self.decay_scheduler is not None:
            # TODO(synk): if decay_rate depends on a traced `step`, pass it into
            # the kernel as a scalar operand instead of baking a Python float.
            decay_rate = float(self.decay_scheduler.decay_rate(step))
        else:
            decay_rate = 1.0

        multiplicative = self.noise_mixture == 'multiplicative'
        if not multiplicative:
            assert self.noise_mixture == 'additive', 'Not supported noise mixture'

        n = x.size
        rows_padded, block_rows = _slab_layout(n)
        slab = _to_slab(x, rows_padded)
        grid = (rows_padded // block_rows,)

        # works for both Python-int and traced `step` / `seed`
        seed_arr = jnp.reshape(
            jnp.asarray(seed, jnp.int32) + jnp.asarray(step, jnp.int32), (1,))

        blk = (block_rows, _LANE_WIDTH)
        x_spec = pl.BlockSpec(blk, lambda i, s: (i, 0))
        o_spec = pl.BlockSpec(blk, lambda i, s: (i, 0))
        out_shape = jax.ShapeDtypeStruct(slab.shape, x.dtype)
        # independent blocks -> "parallel" lets v7x shard across both TCs
        cparams = pltpu.CompilerParams(dimension_semantics=("parallel",))
        mean_decay = float(self.mean) * decay_rate

        if self.noise_type == 'uniform':
            a_decay = math.sqrt(3.0 * self.factor) * decay_rate
            kern = functools.partial(
                _uniform_noise_kernel, a_decay=a_decay, mean_decay=mean_decay,
                multiplicative=multiplicative)
            out_slab = pl.pallas_call(
                kern,
                out_shape=out_shape,
                grid_spec=pltpu.PrefetchScalarGridSpec(
                    num_scalar_prefetch=1, grid=grid,
                    in_specs=[x_spec], out_specs=o_spec),
                compiler_params=cparams,
            )(seed_arr, slab)

        elif self.noise_type == 'gaussian':
            if self.noise_mixture == 'additive':
                std = _std_from_slab(slab, n, block_rows) * self.factor
            else:
                std = jnp.float32(self.factor)
            std_arr = jnp.reshape(std.astype(jnp.float32) * decay_rate, (1, 1))
            std_spec = pl.BlockSpec((1, 1), lambda i, s: (0, 0))
            kern = functools.partial(
                _gaussian_noise_kernel, mean_decay=mean_decay,
                multiplicative=multiplicative)
            out_slab = pl.pallas_call(
                kern,
                out_shape=out_shape,
                grid_spec=pltpu.PrefetchScalarGridSpec(
                    num_scalar_prefetch=1, grid=grid,
                    in_specs=[std_spec, x_spec], out_specs=o_spec),
                compiler_params=cparams,
            )(seed_arr, std_arr, slab)
        else:
            raise AssertionError('Not supported noise type')

        return _from_slab(out_slab, n, x.shape, x.dtype)


# -----------------------------------------------------------------------------
# Demo
# -----------------------------------------------------------------------------
if __name__ == "__main__":
    key = jax.random.PRNGKey(0)
    x = jax.random.normal(key, (2, 4, 16, 16), dtype=jnp.float32)  # NCHW
    step = 3

    # tiled Pallas std reduction matches unbiased jnp.std
    std_p = jax.block_until_ready(pallas_std(x))
    std_ref = jnp.std(x, ddof=1)
    assert bool(jnp.allclose(std_p, std_ref, rtol=2e-3, atol=1e-6)), (std_p, std_ref)

    # uniform / additive
    op_u = NoiseOp('uniform', factor=0.2, mean=0.0, noise_mixture='additive')
    y_u = jax.block_until_ready(op_u(x, step, seed=0))
    assert y_u.shape == x.shape and y_u.dtype == x.dtype
    assert bool(jnp.all(jnp.isfinite(y_u)))
    assert bool(jnp.any(y_u != x))
    a_bound = math.sqrt(3 * 0.2)
    assert bool(jnp.all(jnp.abs(y_u - x) <= a_bound + 1e-5))

    # gaussian / additive (uses tiled in-kernel std reduction)
    op_ga = NoiseOp('gaussian', factor=0.1, mean=0.0, noise_mixture='additive')
    y_ga = jax.block_until_ready(op_ga(x, step, seed=0))
    assert y_ga.shape == x.shape and bool(jnp.all(jnp.isfinite(y_ga)))
    noise_std = jnp.std(y_ga - x)
    target_std = std_ref * 0.1
    assert bool(noise_std > 0.5 * target_std) and bool(noise_std < 2.0 * target_std), (
        noise_std, target_std)

    # gaussian / multiplicative
    op_gm = NoiseOp('gaussian', factor=1.0, mean=1.0, noise_mixture='multiplicative')
    y_gm = jax.block_until_ready(op_gm(x, step, seed=0))
    assert y_gm.shape == x.shape and bool(jnp.all(jnp.isfinite(y_gm)))

    # uniform / multiplicative
    op_um = NoiseOp('uniform', factor=0.05, mean=1.0, noise_mixture='multiplicative')
    y_um = jax.block_until_ready(op_um(x, step, seed=7))
    assert y_um.shape == x.shape and bool(jnp.all(jnp.isfinite(y_um)))

    # eval mode (or add_noise=False) is identity
    op_eval = NoiseOp('uniform', factor=0.2, mean=0.0, noise_mixture='additive')
    op_eval.training = False
    y_eval = jax.block_until_ready(op_eval(x, step))
    assert bool(jnp.all(y_eval == x))

    print("KERNEL_OK")
</pallas_src>

<mosaic_0001>
module attributes {stable_mosaic.version = 11 : i64} {
  func.func @_stats_kernel(%arg0: i32, %arg1: memref<8x512xf32, #tpu.memory_space<vmem>>, %arg2: memref<1x1xf32, #tpu.memory_space<vmem>>, %arg3: memref<1x1xf32, #tpu.memory_space<vmem>>) attributes {dimension_semantics = [#tpu.dimension_semantics<arbitrary>], iteration_bounds = array<i64: 1>, scalar_prefetch = 0 : i64, scratch_operands = 0 : i64, tpu.core_type = #tpu.core_type<tc>, window_params = [{transform_indices = @transform_0, window_bounds = array<i64: 8, 512>}, {pipeline_mode = #tpu.pipeline_mode<synchronous>, transform_indices = @transform_1, window_bounds = array<i64: 1, 1>}, {pipeline_mode = #tpu.pipeline_mode<synchronous>, transform_indices = @transform_2, window_bounds = array<i64: 1, 1>}]} {
    %c0_i32 = arith.constant 0 : i32
    %0 = arith.cmpi eq, %arg0, %c0_i32 : i32
    %1 = arith.extui %0 : i1 to i32
    %c0_i32_0 = arith.constant 0 : i32
    %2 = arith.cmpi ne, %1, %c0_i32_0 : i32
    scf.if %2 {
      %cst_11 = arith.constant 0.000000e+00 : f32
      %21 = vector.broadcast %cst_11 : f32 to vector<1x1xf32>
      %c0_12 = arith.constant 0 : index
      %c0_13 = arith.constant 0 : index
      %22 = vector.load %arg2[%c0_12, %c0_13] : memref<1x1xf32, #tpu.memory_space<vmem>>, vector<1x1xf32>
      tpu.vector_store %arg2[%c0_12, %c0_13], %21 {strides = array<i32>} : memref<1x1xf32, #tpu.memory_space<vmem>>, vector<1x1xf32>,
      %cst_14 = arith.constant 0.000000e+00 : f32
      %23 = vector.broadcast %cst_14 : f32 to vector<1x1xf32>
      %c0_15 = arith.constant 0 : index
      %c0_16 = arith.constant 0 : index
      %24 = vector.load %arg3[%c0_15, %c0_16] : memref<1x1xf32, #tpu.memory_space<vmem>>, vector<1x1xf32>
      tpu.vector_store %arg3[%c0_15, %c0_16], %23 {strides = array<i32>} : memref<1x1xf32, #tpu.memory_space<vmem>>, vector<1x1xf32>,
    } else {
    }
    %c0 = arith.constant 0 : index
    %c0_1 = arith.constant 0 : index
    %3 = vector.load %arg1[%c0, %c0_1] : memref<8x512xf32, #tpu.memory_space<vmem>>, vector<8x512xf32>
    %c0_2 = arith.constant 0 : index
    %c0_3 = arith.constant 0 : index
    %4 = vector.load %arg2[%c0_2, %c0_3] : memref<1x1xf32, #tpu.memory_space<vmem>>, vector<1x1xf32>
    %5 = vector.shape_cast %3 : vector<8x512xf32> to vector<1x8x512xf32>
    %cst = arith.constant dense<0.000000e+00> : vector<1xf32>
    %6 = vector.multi_reduction <add>, %5, %cst [1, 2] : vector<1x8x512xf32> to vector<1xf32>
    %7 = vector.shape_cast %6 : vector<1xf32> to vector<1x1x1xf32>
    %8 = vector.extract %7[0, 0, 0] : f32 from vector<1x1x1xf32>
    %9 = vector.broadcast %8 : f32 to vector<1x1xf32>
    %10 = arith.addf %4, %9 : vector<1x1xf32>
    %c0_4 = arith.constant 0 : index
    %c0_5 = arith.constant 0 : index
    %11 = vector.load %arg2[%c0_4, %c0_5] : memref<1x1xf32, #tpu.memory_space<vmem>>, vector<1x1xf32>
    tpu.vector_store %arg2[%c0_4, %c0_5], %10 {strides = array<i32>} : memref<1x1xf32, #tpu.memory_space<vmem>>, vector<1x1xf32>,
    %c0_6 = arith.constant 0 : index
    %c0_7 = arith.constant 0 : index
    %12 = vector.load %arg3[%c0_6, %c0_7] : memref<1x1xf32, #tpu.memory_space<vmem>>, vector<1x1xf32>
    %13 = arith.mulf %3, %3 : vector<8x512xf32>
    %14 = vector.shape_cast %13 : vector<8x512xf32> to vector<1x8x512xf32>
    %cst_8 = arith.constant dense<0.000000e+00> : vector<1xf32>
    %15 = vector.multi_reduction <add>, %14, %cst_8 [1, 2] : vector<1x8x512xf32> to vector<1xf32>
    %16 = vector.shape_cast %15 : vector<1xf32> to vector<1x1x1xf32>
    %17 = vector.extract %16[0, 0, 0] : f32 from vector<1x1x1xf32>
    %18 = vector.broadcast %17 : f32 to vector<1x1xf32>
    %19 = arith.addf %12, %18 : vector<1x1xf32>
    %c0_9 = arith.constant 0 : index
    %c0_10 = arith.constant 0 : index
    %20 = vector.load %arg3[%c0_9, %c0_10] : memref<1x1xf32, #tpu.memory_space<vmem>>, vector<1x1xf32>
    tpu.vector_store %arg3[%c0_9, %c0_10], %19 {strides = array<i32>} : memref<1x1xf32, #tpu.memory_space<vmem>>, vector<1x1xf32>,
    return
  }
  func.func @transform_0(%arg0: i32) -> (i32, i32) {
    %c0_i32 = arith.constant 0 : i32
    %c0_i32_0 = arith.constant 0 : i32
    return %arg0, %c0_i32 : i32, i32
  }
  func.func @transform_1(%arg0: i32) -> (i32, i32) {
    %c0_i32 = arith.constant 0 : i32
    %c0_i32_0 = arith.constant 0 : i32
    %c0_i32_1 = arith.constant 0 : i32
    return %c0_i32, %c0_i32_0 : i32, i32
  }
  func.func @transform_2(%arg0: i32) -> (i32, i32) {
    %c0_i32 = arith.constant 0 : i32
    %c0_i32_0 = arith.constant 0 : i32
    %c0_i32_1 = arith.constant 0 : i32
    return %c0_i32, %c0_i32_0 : i32, i32
  }
}

</mosaic_0001>

<llo_original>
// kernel: tpu_custom_call.1
$region0: #{tpu_custom_call.1}
  #allocation0 [shape = 'u32[]', space=smem, size = 0x4, offset = 0x4, fixed_abs, tag = 'smem constant byte address 0x4 - core index']
  #allocation1 [shape = 'u32[144,128]{1,0:T(1,128)}', space=vmem, size = 0x12000, scoped, tag = 'internal scratch']
  %s0 = inlined_call_operand.hbm [shape: f32[8,512], index: 0, kind: input, shape index: {}]
  %s1 = inlined_call_operand.hbm [shape: f32[1,1], index: 1, kind: output, shape index: {0}]
  %s2 = inlined_call_operand.hbm [shape: f32[1,1], index: 2, kind: output, shape index: {1}]
  %3 = xla_tuple %s1, %s2
  %s4 = sld [smem:[#allocation0]]
  $region30: #{tpu_custom_call.1} parent=0
    _
  %s6 = ssub.s32 1, %s4
  %s7 = scalar_select 0, %s6, %s4
  $region1: #{tpu_custom_call.1} parent=0
    #allocation2 [shape = 'u8[16384]{0}', space=vmem, size = 0x4000, scoped, tag = 'input window, operand 0, single buffered']
    #allocation3 [shape = 's32[1]{0}', space=sflag, size = 0x4, scoped, tag = 'scoped memory for tpu_custom_call.1']
    #allocation4 [shape = 's32[1]{0}', space=sflag, size = 0x4, scoped, tag = 'scoped memory for tpu_custom_call.1']
    #allocation5 [shape = 'u8[512]{0}', space=vmem, size = 0x400, scoped, tag = 'output window, operand 0, single buffered']
    #allocation6 [shape = 'u8[512]{0}', space=vmem, size = 0x400, scoped, tag = 'output window, operand 1, single buffered']
    #allocation7 [shape = 's32[1]{0}', space=sflag, size = 0x4, scoped, tag = 'scoped memory for tpu_custom_call.1']
    %8 = vsyncpa [#allocation3], 0
    %9 = vsyncpa [#allocation4], 0
    %10 = vsyncpa [#allocation7], 0
    // Predicated region
    $region2: #{tpu_custom_call.1} parent=1 // pred_check
      _
    $region3: #{tpu_custom_call.1} parent=1 // pred_check_branch
      %12 = sbr.rel (0) target = $region5
    $region4: #{tpu_custom_call.1} parent=1 // pred_region
      %s14 = ssub.s32 512, 512
      %15 = vsyncadd [#allocation3], %s14
      %s17 = sshll.u32 [#allocation2], 4
      %s18 = int_to_ptr.vmem [resolvable:$true] %s17
      %20 = dma.hbm_to_vmem [thread:$0]  %s0, 512, %s18, [#allocation3]
    $region5: #{tpu_custom_call.1} parent=1 // pred_fallthru
      _
    // Predicated region
    $region6: #{tpu_custom_call.1} parent=1 // pred_check
      _
    $region7: #{tpu_custom_call.1} parent=1 // pred_check_branch
      %22 = sbr.rel (0) target = $region9
    $region8: #{tpu_custom_call.1} parent=1 // pred_region
      %23 = dma.done [#allocation3], 512
    $region9: #{tpu_custom_call.1} parent=1 // pred_fallthru
      _
    %p24 = scmp.eq.s32.totalorder 0, 0
    // Predicated region
    $region10: #{tpu_custom_call.1} parent=1 // pred_check
      %p25 = pneg %p24
    $region11: #{tpu_custom_call.1} parent=1 // pred_check_branch
      %27 = sbr.rel (%p25) target = $region13
    $region12: #{tpu_custom_call.1} parent=1 // pred_region
      %vm28 = vcmask 0
      %29 = vst.msk [vmem:[#allocation5] sm:$0x1] %vm28, 0.0
      %30 = vst.msk [vmem:[#allocation6] sm:$0x1] %vm28, 0.0
    $region13: #{tpu_custom_call.1} parent=1 // pred_fallthru
      _
    %v31 = vld [vmem:[#allocation2] sm:$0xff]
    %v32 = vld [vmem:[#allocation2 + $0x8] sm:$0xff]
    %v33 = vld [vmem:[#allocation2 + $0x10] sm:$0xff]
    %v34 = vld [vmem:[#allocation2 + $0x18] sm:$0xff]
    %v35 = vld [vmem:[#allocation5] sm:$0x1]
    %v36 = vadd.f32 %v31, %v32
    %v37 = vadd.f32 %v36, %v33
    %v38 = vadd.f32 %v37, %v34
    %39 = vadd.xlane.f32.xlu0 %v38
    %v40 = vpop.xlane.xlu0 %39
    %v41 = vrot.slane %v40, 4
    %v42 = vadd.f32 %v40, %v41
    %v43 = vrot.slane %v42, 2
    %v44 = vadd.f32 %v42, %v43
    %v45 = vrot.slane %v44, 1
    %v46 = vadd.f32 %v44, %v45
    %s47 = vtos %v46
    %v48 = vstv %s47
    %v49 = vadd.f32 %v35, %v48
    %vm50 = vcmask 0
    %51 = vst.msk [vmem:[#allocation5] sm:$0x1] %vm50, %v49
    %v52 = vld [vmem:[#allocation6] sm:$0x1]
    %v53 = vmul.f32 %v31, %v31
    %v54 = vmul.f32 %v32, %v32
    %v55 = vmul.f32 %v33, %v33
    %v56 = vmul.f32 %v34, %v34
    %v57 = vadd.f32 %v53, %v54
    %v58 = vadd.f32 %v57, %v55
    %v59 = vadd.f32 %v58, %v56
    %60 = vadd.xlane.f32.xlu0 %v59
    %v61 = vpop.xlane.xlu0 %60
    %v62 = vrot.slane %v61, 4
    %v63 = vadd.f32 %v61, %v62
    %v64 = vrot.slane %v63, 2
    %v65 = vadd.f32 %v63, %v64
    %v66 = vrot.slane %v65, 1
    %v67 = vadd.f32 %v65, %v66
    %s68 = vtos %v67
    %v69 = vstv %s68
    %v70 = vadd.f32 %v52, %v69
    %71 = vst.msk [vmem:[#allocation6] sm:$0x1] %vm50, %v70
    // Predicated region
    $region14: #{tpu_custom_call.1} parent=1 // pred_check
      _
    $region15: #{tpu_custom_call.1} parent=1 // pred_check_branch
      %73 = sbr.rel (0) target = $region17
    $region16: #{tpu_custom_call.1} parent=1 // pred_region
      %s75 = ssub.s32 16, 16
      %76 = vsyncadd [#allocation4], %s75
      %s78 = sshll.u32 [#allocation5], 4
      %s79 = int_to_ptr.vmem [resolvable:$true] %s78
      %81 = dma.vmem_to_hbm [thread:$0]  %s79, 16, %s1, [#allocation4]
    $region17: #{tpu_custom_call.1} parent=1 // pred_fallthru
      _
    // Predicated region
    $region18: #{tpu_custom_call.1} parent=1 // pred_check
      _
    $region19: #{tpu_custom_call.1} parent=1 // pred_check_branch
      %83 = sbr.rel (0) target = $region21
    $region20: #{tpu_custom_call.1} parent=1 // pred_region
      %s85 = ssub.s32 16, 16
      %86 = vsyncadd [#allocation7], %s85
      %s88 = sshll.u32 [#allocation6], 4
      %s89 = int_to_ptr.vmem [resolvable:$true] %s88
      %91 = dma.vmem_to_hbm [thread:$0]  %s89, 16, %s2, [#allocation7]
    $region21: #{tpu_custom_call.1} parent=1 // pred_fallthru
      _
    // Predicated region
    $region22: #{tpu_custom_call.1} parent=1 // pred_check
      _
    $region23: #{tpu_custom_call.1} parent=1 // pred_check_branch
      %93 = sbr.rel (0) target = $region25
    $region24: #{tpu_custom_call.1} parent=1 // pred_region
      %94 = dma.done [#allocation4], 16
    $region25: #{tpu_custom_call.1} parent=1 // pred_fallthru
      _
    // Predicated region
    $region26: #{tpu_custom_call.1} parent=1 // pred_check
      _
    $region27: #{tpu_custom_call.1} parent=1 // pred_check_branch
      %96 = sbr.rel (0) target = $region29
    $region28: #{tpu_custom_call.1} parent=1 // pred_region
      %97 = dma.done [#allocation7], 16
    $region29: #{tpu_custom_call.1} parent=1 // pred_fallthru
      _
    %98 = vsyncpa [#allocation3], 1
    %99 = vsyncpa [#allocation4], 1
    %100 = vsyncpa [#allocation7], 1

</llo_original>
